<compile_context>
chip_gen: v7x
topology: tpu7x:2x2x1
jax: 0.10.0
libtpu: 0.0.40
codegen_flags: <defaults>
</compile_context>

<pallas_src>
import jax
import jax.numpy as jnp
from jax.experimental import pallas as pl
from jax.experimental.pallas import tpu as pltpu


# ---------------- Pallas kernel ----------------

def _copy_kernel(x_ref, o_ref):
    # One (tm, tc) tile: straight VMEM copy (pure data movement).
    o_ref[...] = x_ref[...]


# ---------------- tiling helpers ----------------

_TILE_BUDGET_BYTES = 2 * 1024 * 1024   # per-tile budget; 4 live buffers ~= 8 MiB VMEM
_LANE = 128
_SUBLANE = 8


def _flatten_lane_dense(shape):
    """Pick an (M, C) view of a contiguous array with C a wide multiple of 128
    when the total element count allows it; otherwise fall back to the
    original trailing dim."""
    total = 1
    for d in shape:
        total *= int(d)
    for w in (4096, 2048, 1024, 512, 256, 128):
        if total % w == 0:
            return total // w, w
    c = int(shape[-1])
    return total // c, c


def _pick_tiles(m, c, itemsize):
    """VMEM-byte-aware (tm, tc): tc full or a multiple of 128, tm a multiple
    of 8 (or the full extent), each tile <= ~_TILE_BUDGET_BYTES."""
    # Column tile: keep full width if 8 rows of it fit the budget.
    if c * itemsize * _SUBLANE <= _TILE_BUDGET_BYTES:
        tc = c
    else:
        tc = max(_LANE, (_TILE_BUDGET_BYTES // (_SUBLANE * itemsize)) // _LANE * _LANE)
        tc = min(tc, c)
    # Row tile: largest multiple of 8 that keeps the tile under budget.
    rows = max(_SUBLANE, _TILE_BUDGET_BYTES // (tc * itemsize))
    tm = min(m, (rows // _SUBLANE) * _SUBLANE)
    return max(tm, 1), tc


# ---------------- pallas_call wrapper ----------------

@jax.jit
def _identity_copy(x2d):
    m, c = x2d.shape
    itemsize = x2d.dtype.itemsize
    tm, tc = _pick_tiles(m, c, itemsize)
    nbytes = x2d.size * itemsize
    return pl.pallas_call(
        _copy_kernel,
        out_shape=jax.ShapeDtypeStruct((m, c), x2d.dtype),
        grid=(pl.cdiv(m, tm), pl.cdiv(c, tc)),
        in_specs=[pl.BlockSpec((tm, tc), lambda i, j: (i, j))],
        out_specs=pl.BlockSpec((tm, tc), lambda i, j: (i, j)),
        compiler_params=pltpu.CompilerParams(
            dimension_semantics=("parallel", "parallel"),
        ),
        cost_estimate=pl.CostEstimate(
            flops=0, transcendentals=0, bytes_accessed=2 * nbytes),
    )(x2d)


def double_identity_forward(inp, inputb=None, cache_index=0):
    """Pallas implementation of DoubleIdentity.forward(input, inputb, cache_index).

    Semantics: returns `input` unchanged. `inputb` / `cache_index` never enter
    the traced path (they are unused by the reference forward)."""
    del inputb, cache_index
    if inp.ndim == 0 or inp.size == 0:
        return inp  # nothing to tile; identity is trivially the value itself
    orig_shape = inp.shape
    m, c = _flatten_lane_dense(orig_shape)
    out = _identity_copy(inp.reshape(m, c))
    return out.reshape(orig_shape)


# TODO(synk): roll_cache() is a stateless no-op in the PyTorch module; nothing to port.


if __name__ == "__main__":
    key = jax.random.PRNGKey(0)
    ka, kb = jax.random.split(key)

    # Small shapes consistent with the module's usage (batch=2, seq=8, hidden=32).
    x = jax.random.normal(ka, (2, 8, 32), dtype=jnp.float32)
    xb = jax.random.normal(kb, (2, 8, 32), dtype=jnp.float32)
    cache_index = 0

    out = double_identity_forward(x, xb, cache_index)
    out = jax.block_until_ready(out)

    assert out.shape == x.shape, "shape mismatch"
    assert out.dtype == x.dtype, "dtype mismatch"
    assert jnp.array_equal(out, x), "identity mismatch"

    print("KERNEL_OK")
</pallas_src>

<mosaic_0001>
module attributes {stable_mosaic.version = 11 : i64} {
  func.func @_copy_kernel(%arg0: i32, %arg1: i32, %arg2: memref<1x512xf32, #tpu.memory_space<vmem>>, %arg3: memref<1x512xf32, #tpu.memory_space<vmem>>) attributes {dimension_semantics = [#tpu.dimension_semantics<parallel>, #tpu.dimension_semantics<parallel>], iteration_bounds = array<i64: 1, 1>, scalar_prefetch = 0 : i64, scratch_operands = 0 : i64, tpu.core_type = #tpu.core_type<tc>, window_params = [{transform_indices = @transform_0, window_bounds = array<i64: 1, 512>}, {transform_indices = @transform_1, window_bounds = array<i64: 1, 512>}]} {
    %c0 = arith.constant 0 : index
    %c0_0 = arith.constant 0 : index
    %0 = vector.load %arg2[%c0, %c0_0] : memref<1x512xf32, #tpu.memory_space<vmem>>, vector<1x512xf32>
    %c0_1 = arith.constant 0 : index
    %c0_2 = arith.constant 0 : index
    %1 = vector.load %arg3[%c0_1, %c0_2] : memref<1x512xf32, #tpu.memory_space<vmem>>, vector<1x512xf32>
    tpu.vector_store %arg3[%c0_1, %c0_2], %0 {strides = array<i32>} : memref<1x512xf32, #tpu.memory_space<vmem>>, vector<1x512xf32>,
    return
  }
  func.func @transform_0(%arg0: i32, %arg1: i32) -> (i32, i32) {
    %c0_i32 = arith.constant 0 : i32
    return %arg0, %arg1 : i32, i32
  }
  func.func @transform_1(%arg0: i32, %arg1: i32) -> (i32, i32) {
    %c0_i32 = arith.constant 0 : i32
    return %arg0, %arg1 : i32, i32
  }
}

</mosaic_0001>

<llo_original>
// kernel: _identity_copy.1
$region0: #{_identity_copy.1}
  #allocation0 [shape = 'u32[]', space=smem, size = 0x4, offset = 0x4, fixed_abs, tag = 'smem constant byte address 0x4 - core index']
  #allocation1 [shape = 'u32[144,128]{1,0:T(1,128)}', space=vmem, size = 0x12000, scoped, tag = 'internal scratch']
  %s0 = inlined_call_operand.hbm [shape: f32[1,512], index: 0, kind: input, shape index: {}]
  %s1 = inlined_call_operand.hbm [shape: f32[1,512], index: 1, kind: output, shape index: {}]
  %s2 = sld [smem:[#allocation0]]
  $region18: #{_identity_copy.1} parent=0
    _
  %s4 = ssub.s32 1, %s2
  %s5 = scalar_select 0, %s4, %s2
  $region1: #{_identity_copy.1} parent=0
    #allocation2 [shape = 'u8[2048]{0}', space=vmem, size = 0x800, scoped, tag = 'input window, operand 0, single buffered']
    #allocation3 [shape = 's32[1]{0}', space=sflag, size = 0x4, scoped, tag = 'scoped memory for _identity_copy.1']
    #allocation4 [shape = 's32[1]{0}', space=sflag, size = 0x4, scoped, tag = 'scoped memory for _identity_copy.1']
    #allocation5 [shape = 'u8[2048]{0}', space=vmem, size = 0x800, scoped, tag = 'output window, operand 0, single buffered']
    %6 = vsyncpa [#allocation3], 0
    %7 = vsyncpa [#allocation4], 0
    // Predicated region
    $region2: #{_identity_copy.1} parent=1 // pred_check
      _
    $region3: #{_identity_copy.1} parent=1 // pred_check_branch
      %9 = sbr.rel (0) target = $region5
    $region4: #{_identity_copy.1} parent=1 // pred_region
      %s11 = ssub.s32 64, 64
      %12 = vsyncadd [#allocation3], %s11
      %s14 = sshll.u32 [#allocation2], 4
      %s15 = int_to_ptr.vmem [resolvable:$true] %s14
      %17 = dma.hbm_to_vmem [thread:$0]  %s0, 64, %s15, [#allocation3]
    $region5: #{_identity_copy.1} parent=1 // pred_fallthru
      _
    // Predicated region
    $region6: #{_identity_copy.1} parent=1 // pred_check
      _
    $region7: #{_identity_copy.1} parent=1 // pred_check_branch
      %19 = sbr.rel (0) target = $region9
    $region8: #{_identity_copy.1} parent=1 // pred_region
      %20 = dma.done [#allocation3], 64
    $region9: #{_identity_copy.1} parent=1 // pred_fallthru
      _
    %v21 = vld [vmem:[#allocation2] sm:$0xf]
    %v22 = vlaneseq
    %vm23 = vcmp.ge.s32.totalorder %v22, 0
    %vm24 = vcmp.lt.s32.totalorder %v22, 512
    %vm25 = vmand %vm23, %vm24
    %26 = vst.msk [vmem:[#allocation5] sm:$0xf] %vm25, %v21
    // Predicated region
    $region10: #{_identity_copy.1} parent=1 // pred_check
      _
    $region11: #{_identity_copy.1} parent=1 // pred_check_branch
      %28 = sbr.rel (0) target = $region13
    $region12: #{_identity_copy.1} parent=1 // pred_region
      %s30 = ssub.s32 64, 64
      %31 = vsyncadd [#allocation4], %s30
      %s33 = sshll.u32 [#allocation5], 4
      %s34 = int_to_ptr.vmem [resolvable:$true] %s33
      %36 = dma.vmem_to_hbm [thread:$0]  %s34, 64, %s1, [#allocation4]
    $region13: #{_identity_copy.1} parent=1 // pred_fallthru
      _
    // Predicated region
    $region14: #{_identity_copy.1} parent=1 // pred_check
      _
    $region15: #{_identity_copy.1} parent=1 // pred_check_branch
      %38 = sbr.rel (0) target = $region17
    $region16: #{_identity_copy.1} parent=1 // pred_region
      %39 = dma.done [#allocation4], 64
    $region17: #{_identity_copy.1} parent=1 // pred_fallthru
      _
    %40 = vsyncpa [#allocation3], 1
    %41 = vsyncpa [#allocation4], 1

</llo_original>
